<compile_context>
chip_gen: v5e
topology: v5e:2x2
jax: 0.10.0
libtpu: 0.0.40
codegen_flags: <defaults>
</compile_context>

<pallas_src>
import jax
import jax.numpy as jnp
from jax.experimental import pallas as pl
from jax.experimental.pallas import tpu as pltpu


def _round_up(x, m):
    return ((x + m - 1) // m) * m


def _pick_tile_p(P, K_pad):
    """Lane-dim tile for the flattened spatial axis.

    Targets ~2 MiB per bf16 patch buffer, stays a multiple of 128, and divides P whenever P is
    already a multiple of 128 (typical power-of-two spatial dims) so P_pad == P and no padded
    columns / post-kernel slice are needed.
    """
    LANE = 128
    cap = (2 << 20) // max(1, K_pad * 2)               # lanes giving ~2 MiB of bf16 patches
    cap = max(LANE, min(2048, (cap // LANE) * LANE))
    if P % LANE == 0:
        q = P // LANE
        d = 1
        for cand in range(min(q, cap // LANE), 0, -1):
            if q % cand == 0:
                d = cand
                break
        return d * LANE, P                              # tile_p, P_pad (== P)
    P_pad = _round_up(P, LANE)
    if P_pad <= cap:
        return P_pad, P_pad
    return cap, _round_up(P, cap)


def sampling_block_forward(x, weight, bias=None, *, c_split=None):
    """down=True path. x: (N, C_in, H, W) f32 NCHW, weight: (C_out, C_in, 4, 4).

    Returns bf16 (N, C_out, H//2, W//2). The Conv2d bias is intentionally not applied:
    InstanceNorm2d(affine=False) subtracts the per-channel spatial mean immediately afterwards,
    which cancels any per-channel bias exactly.
    """
    # TODO(synk): ConvTranspose2d path (down=False) not implemented; default down=True only.
    del bias
    N, C_in, H, W = x.shape
    C_out = weight.shape[0]
    kh = kw = 4
    H_out, W_out = H // 2, W // 2
    P = H_out * W_out
    K = C_in * kh * kw

    # ---- padded / aligned sizes ------------------------------------------------------------
    K_pad = _round_up(K, 16)                 # bf16 sublane packing only; NOT padded to 128
    C_out_pad = _round_up(C_out, 16)         # bf16 sublane alignment for the output block
    tile_p, P_pad = _pick_tile_p(P, K_pad)
    n_ptiles = P_pad // tile_p

    # Channel split across TensorCores for tiny batches (v7x has 2 TCs; single-TC chips ignore it).
    if c_split is None:
        c_split = 2 if (N == 1 and C_out_pad % 32 == 0) else 1
    assert C_out_pad % (16 * c_split) == 0
    C_blk = C_out_pad // c_split

    # ---- im2col in (N, K, P) layout, bf16 BEFORE pad/stack (halves wrapper HBM traffic) ------
    # TODO(synk): fuse im2col fully in-kernel (phase-decomposed x via memory_space=pl.ANY +
    # manual DMA) to drop the remaining materialized patch stream (~2x more HBM savings).
    xp = jnp.pad(x.astype(jnp.bfloat16), ((0, 0), (0, 0), (1, 1), (1, 1)))
    cols = [xp[:, :, i:i + 2 * H_out:2, j:j + 2 * W_out:2]
            for i in range(kh) for j in range(kw)]
    patches = jnp.stack(cols, axis=2).reshape(N, K, P)        # K order = ci*16 + i*4 + j
    if K_pad != K or P_pad != P:
        patches = jnp.pad(patches, ((0, 0), (0, K_pad - K), (0, P_pad - P)))

    # Weight in matching K ordering; zero padding does not change the dot product.
    w_mat = weight.reshape(C_out, K).astype(jnp.bfloat16)
    if C_out_pad != C_out or K_pad != K:
        w_mat = jnp.pad(w_mat, ((0, C_out_pad - C_out), (0, K_pad - K)))

    inv_p = 1.0 / float(P)
    eps = 1e-5
    slope = 0.2
    out_dtype = jnp.bfloat16

    def kernel(w_ref, p_ref, o_ref, sum_ref, sq_ref):
        pt = pl.program_id(2)

        @pl.when(pt == 0)
        def _init():
            sum_ref[...] = jnp.zeros_like(sum_ref)
            sq_ref[...] = jnp.zeros_like(sq_ref)

        # Conv2d hot path: (C_blk, K_pad) @ (K_pad, tile_p) on the MXU, f32 accumulation.
        y = jnp.dot(w_ref[...], p_ref[0], preferred_element_type=jnp.float32)

        # Per-tile instance-norm partial stats in f32 (overlaps the next patch DMA).
        # Padded K rows / padded P columns are exact zeros -> contribute nothing.
        sum_ref[...] += jnp.sum(y, axis=-1, keepdims=True)
        sq_ref[...] += jnp.sum(y * y, axis=-1, keepdims=True)

        start = pl.multiple_of(pt * tile_p, 128)
        o_ref[0, :, pl.ds(start, tile_p)] = y.astype(out_dtype)   # lane-dense bf16 store

        # Finalize once the full per-image / per-channel-block conv output is resident in VMEM.
        @pl.when(pt == pl.num_programs(2) - 1)
        def _finalize():
            mean = sum_ref[...] * inv_p                            # (C_blk, 1) f32
            var = jnp.maximum(sq_ref[...] * inv_p - mean * mean, 0.0)
            scale = jax.lax.rsqrt(var + eps)

            # Chunked normalize + LeakyReLU over the resident bf16 block (bounded temporaries).
            @pl.loop(0, n_ptiles)
            def _(t):
                off = pl.multiple_of(t * tile_p, 128)
                yb = o_ref[0, :, pl.ds(off, tile_p)].astype(jnp.float32)
                yn = (yb - mean) * scale
                yn = jnp.where(yn >= 0, yn, slope * yn)
                o_ref[0, :, pl.ds(off, tile_p)] = yn.astype(out_dtype)

    # ---- VMEM budget: 2x resident output block + 2x patch tile + weight + stats + headroom ---
    out_blk = C_blk * P_pad * 2
    patch_blk = K_pad * tile_p * 2
    w_blk = C_blk * K_pad * 2
    stats = 2 * C_blk * 128 * 4
    need = 2 * out_blk + 2 * patch_blk + w_blk + stats
    vmem_limit = min(100 * (1 << 20), max(32 * (1 << 20), int(need * 1.5) + (2 << 20)))
    # TODO(synk): for very large layers (2*out_blk >~ 24 MiB) fall back to a two-pass design
    # (stats pass + normalize pass via input_output_aliases) so the resident block fits v7x VMEM.

    out = pl.pallas_call(
        kernel,
        out_shape=jax.ShapeDtypeStruct((N, C_out_pad, P_pad), out_dtype),
        grid_spec=pltpu.PrefetchScalarGridSpec(
            num_scalar_prefetch=0,
            grid=(c_split, N, n_ptiles),
            in_specs=[
                pl.BlockSpec((C_blk, K_pad), lambda c, n, p: (c, 0)),
                pl.BlockSpec((1, K_pad, tile_p), lambda c, n, p: (n, 0, p)),
            ],
            out_specs=pl.BlockSpec((1, C_blk, P_pad), lambda c, n, p: (n, c, 0)),
            scratch_shapes=[
                pltpu.VMEM((C_blk, 1), jnp.float32),   # per-channel sum
                pltpu.VMEM((C_blk, 1), jnp.float32),   # per-channel sum of squares
            ],
        ),
        compiler_params=pltpu.CompilerParams(
            # c / N are parallel (megacore); the P-tile axis revisits the resident output block.
            dimension_semantics=("parallel", "parallel", "arbitrary"),
            vmem_limit_bytes=vmem_limit),
    )(w_mat, patches)

    # (N, C_out, P) slices straight back to NCHW (no-op when C_out / P are already aligned).
    return out[:, :C_out, :P].reshape(N, C_out, H_out, W_out)


def reference_forward(x, weight, bias):
    y = jax.lax.conv_general_dilated(
        x, weight, window_strides=(2, 2), padding=((1, 1), (1, 1)),
        dimension_numbers=('NCHW', 'OIHW', 'NCHW'))
    y = y + bias.reshape(1, -1, 1, 1)
    mean = jnp.mean(y, axis=(2, 3), keepdims=True)
    var = jnp.mean((y - mean) ** 2, axis=(2, 3), keepdims=True)
    yn = (y - mean) * jax.lax.rsqrt(var + 1e-5)
    return jnp.where(yn >= 0, yn, 0.2 * yn)


if __name__ == "__main__":
    key = jax.random.PRNGKey(0)
    k1, k2, k3, k4, k5, k6 = jax.random.split(key, 6)

    # --- test 1: batch=2 (N axis feeds the 'parallel' megacore dimension) --------------------
    N, C_in, H, W, C_out = 2, 4, 16, 16, 8
    x = jax.random.normal(k1, (N, C_in, H, W), dtype=jnp.float32)
    weight = jax.random.normal(k2, (C_out, C_in, 4, 4), dtype=jnp.float32) / jnp.sqrt(C_in * 16)
    bias = jax.random.normal(k3, (C_out,), dtype=jnp.float32) * 0.1

    out = sampling_block_forward(x, weight, bias)
    jax.block_until_ready(out)
    ref = reference_forward(x, weight, bias)
    err = float(jnp.max(jnp.abs(out.astype(jnp.float32) - ref)))
    # bf16 matmul operands + bf16 output storage -> a few e-3..e-2 absolute error post-norm.
    assert jnp.allclose(out.astype(jnp.float32), ref, atol=4e-2, rtol=4e-2), err

    # --- test 2: batch=1, wider C_out -> exercises the channel-split (c_split=2) grid axis ---
    N2, C_out2 = 1, 32
    x2 = jax.random.normal(k4, (N2, C_in, H, W), dtype=jnp.float32)
    weight2 = jax.random.normal(k5, (C_out2, C_in, 4, 4), dtype=jnp.float32) / jnp.sqrt(C_in * 16)
    bias2 = jax.random.normal(k6, (C_out2,), dtype=jnp.float32) * 0.1

    out2 = sampling_block_forward(x2, weight2, bias2)
    jax.block_until_ready(out2)
    ref2 = reference_forward(x2, weight2, bias2)
    err2 = float(jnp.max(jnp.abs(out2.astype(jnp.float32) - ref2)))
    assert jnp.allclose(out2.astype(jnp.float32), ref2, atol=4e-2, rtol=4e-2), err2

    print("KERNEL_OK")
</pallas_src>

<mosaic_0001>
module attributes {stable_mosaic.version = 11 : i64} {
  func.func @kernel(%arg0: i32, %arg1: i32, %arg2: i32, %arg3: memref<16x64xbf16, #tpu.memory_space<vmem>>, %arg4: memref<1x64x128xbf16, #tpu.memory_space<vmem>>, %arg5: memref<1x16x128xbf16, #tpu.memory_space<vmem>>, %arg6: memref<16x1xf32, #tpu.memory_space<vmem>>, %arg7: memref<16x1xf32, #tpu.memory_space<vmem>>) attributes {dimension_semantics = [#tpu.dimension_semantics<parallel>, #tpu.dimension_semantics<parallel>, #tpu.dimension_semantics<arbitrary>], iteration_bounds = array<i64: 1, 2, 1>, scalar_prefetch = 0 : i64, scratch_operands = 2 : i64, tpu.core_type = #tpu.core_type<tc>, window_params = [{transform_indices = @transform_0, window_bounds = array<i64: 16, 64>}, {transform_indices = @transform_1, window_bounds = array<i64: 1, 64, 128>}, {transform_indices = @transform_2, window_bounds = array<i64: 1, 16, 128>}]} {
    %c0_i32 = arith.constant 0 : i32
    %0 = arith.cmpi eq, %arg2, %c0_i32 : i32
    %1 = arith.extui %0 : i1 to i32
    %c0_i32_0 = arith.constant 0 : i32
    %2 = arith.cmpi ne, %1, %c0_i32_0 : i32
    scf.if %2 {
      %cst_19 = arith.constant 0.000000e+00 : f32
      %28 = vector.broadcast %cst_19 : f32 to vector<16x1xf32>
      %c0_20 = arith.constant 0 : index
      %c0_21 = arith.constant 0 : index
      %29 = vector.load %arg6[%c0_20, %c0_21] : memref<16x1xf32, #tpu.memory_space<vmem>>, vector<16x1xf32>
      tpu.vector_store %arg6[%c0_20, %c0_21], %28 {strides = array<i32>} : memref<16x1xf32, #tpu.memory_space<vmem>>, vector<16x1xf32>,
      %cst_22 = arith.constant 0.000000e+00 : f32
      %30 = vector.broadcast %cst_22 : f32 to vector<16x1xf32>
      %c0_23 = arith.constant 0 : index
      %c0_24 = arith.constant 0 : index
      %31 = vector.load %arg7[%c0_23, %c0_24] : memref<16x1xf32, #tpu.memory_space<vmem>>, vector<16x1xf32>
      tpu.vector_store %arg7[%c0_23, %c0_24], %30 {strides = array<i32>} : memref<16x1xf32, #tpu.memory_space<vmem>>, vector<16x1xf32>,
    } else {
    }
    %c0 = arith.constant 0 : index
    %c0_1 = arith.constant 0 : index
    %3 = vector.load %arg3[%c0, %c0_1] : memref<16x64xbf16, #tpu.memory_space<vmem>>, vector<16x64xbf16>
    %c0_2 = arith.constant 0 : index
    %c0_3 = arith.constant 0 : index
    %c0_4 = arith.constant 0 : index
    %4 = vector.load %arg4[%c0_2, %c0_3, %c0_4] : memref<1x64x128xbf16, #tpu.memory_space<vmem>>, vector<1x64x128xbf16>
    %5 = vector.shape_cast %4 : vector<1x64x128xbf16> to vector<64x128xbf16>
    %cst = arith.constant dense<0.000000e+00> : vector<16x128xf32>
    %6 = tpu.matmul %3, %5, %cst {dimension_numbers = #tpu.dot_dimension_numbers<[1], [0], [0], [1], [0, 0, 1, 1], [], []>} : vector<16x64xbf16>, vector<64x128xbf16>, vector<16x128xf32> -> vector<16x128xf32>
    %c0_5 = arith.constant 0 : index
    %c0_6 = arith.constant 0 : index
    %7 = vector.load %arg6[%c0_5, %c0_6] : memref<16x1xf32, #tpu.memory_space<vmem>>, vector<16x1xf32>
    %cst_7 = arith.constant dense<0.000000e+00> : vector<16xf32>
    %8 = vector.multi_reduction <add>, %6, %cst_7 [1] : vector<16x128xf32> to vector<16xf32>
    %9 = vector.shape_cast %8 : vector<16xf32> to vector<16x1xf32>
    %10 = arith.addf %7, %9 : vector<16x1xf32>
    %c0_8 = arith.constant 0 : index
    %c0_9 = arith.constant 0 : index
    %11 = vector.load %arg6[%c0_8, %c0_9] : memref<16x1xf32, #tpu.memory_space<vmem>>, vector<16x1xf32>
    tpu.vector_store %arg6[%c0_8, %c0_9], %10 {strides = array<i32>} : memref<16x1xf32, #tpu.memory_space<vmem>>, vector<16x1xf32>,
    %c0_10 = arith.constant 0 : index
    %c0_11 = arith.constant 0 : index
    %12 = vector.load %arg7[%c0_10, %c0_11] : memref<16x1xf32, #tpu.memory_space<vmem>>, vector<16x1xf32>
    %13 = arith.mulf %6, %6 : vector<16x128xf32>
    %cst_12 = arith.constant dense<0.000000e+00> : vector<16xf32>
    %14 = vector.multi_reduction <add>, %13, %cst_12 [1] : vector<16x128xf32> to vector<16xf32>
    %15 = vector.shape_cast %14 : vector<16xf32> to vector<16x1xf32>
    %16 = arith.addf %12, %15 : vector<16x1xf32>
    %c0_13 = arith.constant 0 : index
    %c0_14 = arith.constant 0 : index
    %17 = vector.load %arg7[%c0_13, %c0_14] : memref<16x1xf32, #tpu.memory_space<vmem>>, vector<16x1xf32>
    tpu.vector_store %arg7[%c0_13, %c0_14], %16 {strides = array<i32>} : memref<16x1xf32, #tpu.memory_space<vmem>>, vector<16x1xf32>,
    %c128_i32 = arith.constant 128 : i32
    %18 = arith.muli %arg2, %c128_i32 : i32
    %19 = tpu.assume_multiple %18, 128 : i32
    %20 = arith.truncf %6 : vector<16x128xf32> to vector<16x128xbf16>
    %c0_15 = arith.constant 0 : index
    %c0_16 = arith.constant 0 : index
    %21 = arith.index_cast %19 : i32 to index
    %22 = vector.load %arg5[%c0_15, %c0_16, %21] : memref<1x16x128xbf16, #tpu.memory_space<vmem>>, vector<1x16x128xbf16>
    %23 = vector.shape_cast %22 : vector<1x16x128xbf16> to vector<16x128xbf16>
    %24 = vector.shape_cast %20 : vector<16x128xbf16> to vector<1x16x128xbf16>
    tpu.vector_store %arg5[%c0_15, %c0_16, %21], %24 {strides = array<i32>} : memref<1x16x128xbf16, #tpu.memory_space<vmem>>, vector<1x16x128xbf16>,
    %c0_i32_17 = arith.constant 0 : i32
    %25 = arith.cmpi eq, %arg2, %c0_i32_17 : i32
    %26 = arith.extui %25 : i1 to i32
    %c0_i32_18 = arith.constant 0 : i32
    %27 = arith.cmpi ne, %26, %c0_i32_18 : i32
    scf.if %27 {
      %c0_19 = arith.constant 0 : index
      %c0_20 = arith.constant 0 : index
      %28 = vector.load %arg6[%c0_19, %c0_20] : memref<16x1xf32, #tpu.memory_space<vmem>>, vector<16x1xf32>
      %cst_21 = arith.constant 1.562500e-02 : f32
      %29 = vector.broadcast %cst_21 : f32 to vector<16x1xf32>
      %30 = arith.mulf %28, %29 : vector<16x1xf32>
      %c0_22 = arith.constant 0 : index
      %c0_23 = arith.constant 0 : index
      %31 = vector.load %arg7[%c0_22, %c0_23] : memref<16x1xf32, #tpu.memory_space<vmem>>, vector<16x1xf32>
      %cst_24 = arith.constant 1.562500e-02 : f32
      %32 = vector.broadcast %cst_24 : f32 to vector<16x1xf32>
      %33 = arith.mulf %31, %32 : vector<16x1xf32>
      %34 = arith.mulf %30, %30 : vector<16x1xf32>
      %35 = arith.subf %33, %34 : vector<16x1xf32>
      %cst_25 = arith.constant 0.000000e+00 : f32
      %36 = vector.broadcast %cst_25 : f32 to vector<16x1xf32>
      %37 = arith.maximumf %35, %36 : vector<16x1xf32>
      %cst_26 = arith.constant 9.99999974E-6 : f32
      %38 = vector.broadcast %cst_26 : f32 to vector<16x1xf32>
      %39 = arith.addf %37, %38 : vector<16x1xf32>
      %40 = math.rsqrt %39 : vector<16x1xf32>
      %c0_i32_27 = arith.constant 0 : i32
      %c1_i32 = arith.constant 1 : i32
      %41 = arith.muli %c0_i32_27, %c1_i32 : i32
      %c0_i32_28 = arith.constant 0 : i32
      %42 = arith.addi %c0_i32_28, %41 : i32
      %c128_i32_29 = arith.constant 128 : i32
      %43 = arith.muli %42, %c128_i32_29 : i32
      %44 = tpu.assume_multiple %43, 128 : i32
      %c0_30 = arith.constant 0 : index
      %c0_31 = arith.constant 0 : index
      %45 = arith.index_cast %44 : i32 to index
      %46 = vector.load %arg5[%c0_30, %c0_31, %45] : memref<1x16x128xbf16, #tpu.memory_space<vmem>>, vector<1x16x128xbf16>
      %47 = vector.shape_cast %46 : vector<1x16x128xbf16> to vector<16x128xbf16>
      %48 = arith.extf %47 : vector<16x128xbf16> to vector<16x128xf32>
      %49 = vector.broadcast %30 : vector<16x1xf32> to vector<16x128xf32>
      %50 = arith.subf %48, %49 : vector<16x128xf32>
      %51 = vector.broadcast %40 : vector<16x1xf32> to vector<16x128xf32>
      %52 = arith.mulf %50, %51 : vector<16x128xf32>
      %cst_32 = arith.constant 0.000000e+00 : f32
      %53 = vector.broadcast %cst_32 : f32 to vector<16x128xf32>
      %54 = arith.cmpf oge, %52, %53 : vector<16x128xf32>
      %cst_33 = arith.constant 2.000000e-01 : f32
      %55 = vector.broadcast %cst_33 : f32 to vector<16x128xf32>
      %56 = arith.mulf %55, %52 : vector<16x128xf32>
      %57 = arith.select %54, %52, %56 : vector<16x128xi1>, vector<16x128xf32>
      %58 = arith.truncf %57 : vector<16x128xf32> to vector<16x128xbf16>
      %c0_34 = arith.constant 0 : index
      %c0_35 = arith.constant 0 : index
      %59 = arith.index_cast %44 : i32 to index
      %60 = vector.load %arg5[%c0_34, %c0_35, %59] : memref<1x16x128xbf16, #tpu.memory_space<vmem>>, vector<1x16x128xbf16>
      %61 = vector.shape_cast %60 : vector<1x16x128xbf16> to vector<16x128xbf16>
      %62 = vector.shape_cast %58 : vector<16x128xbf16> to vector<1x16x128xbf16>
      tpu.vector_store %arg5[%c0_34, %c0_35, %59], %62 {strides = array<i32>} : memref<1x16x128xbf16, #tpu.memory_space<vmem>>, vector<1x16x128xbf16>,
      %c1_i32_36 = arith.constant 1 : i32
    } else {
    }
    return
  }
  func.func @transform_0(%arg0: i32, %arg1: i32, %arg2: i32) -> (i32, i32) {
    %c0_i32 = arith.constant 0 : i32
    %c0_i32_0 = arith.constant 0 : i32
    return %arg0, %c0_i32 : i32, i32
  }
  func.func @transform_1(%arg0: i32, %arg1: i32, %arg2: i32) -> (i32, i32, i32) {
    %c0_i32 = arith.constant 0 : i32
    %c0_i32_0 = arith.constant 0 : i32
    return %arg1, %c0_i32, %arg2 : i32, i32, i32
  }
  func.func @transform_2(%arg0: i32, %arg1: i32, %arg2: i32) -> (i32, i32, i32) {
    %c0_i32 = arith.constant 0 : i32
    %c0_i32_0 = arith.constant 0 : i32
    return %arg1, %arg0, %c0_i32 : i32, i32, i32
  }
}

</mosaic_0001>

<llo_original>
// kernel: tpu_custom_call.1
$region0: #{tpu_custom_call.1}
  #allocation0 [shape = 'u32[]', space=smem, size = 0x4, offset = 0x4, fixed_abs, tag = 'smem constant byte address 0x4 - core index']
  #allocation1 [shape = 'u32[72,128]{1,0:T(1,128)}', space=vmem, size = 0x9000, scoped, tag = 'internal scratch']
  #allocation2 [shape = 'f32[16,1]{1,0:T(8,128)}', space=vmem, size = 0x2000, scoped, tag = 'scratch operand']
  #allocation3 [shape = 'f32[16,1]{1,0:T(8,128)}', space=vmem, size = 0x2000, scoped, tag = 'scratch operand']
  %s0 = inlined_call_operand.hbm [shape: bf16[16,64], index: 0, kind: input, shape index: {}]
  %s1 = inlined_call_operand.hbm [shape: bf16[2,64,128], index: 1, kind: input, shape index: {}]
  %s2 = inlined_call_operand.hbm [shape: bf16[2,16,128], index: 2, kind: output, shape index: {}]
  %s3 = sld [smem:[#allocation0]]
  $region57: #{tpu_custom_call.1} parent=0
    _
  %s5 = ssub.s32 1, %s3
  %s6 = scalar_select 0, %s5, %s3
  $region1: #{tpu_custom_call.1} parent=0
    #allocation4 [shape = 'u8[4096]{0}', space=vmem, size = 0x1000, scoped, tag = 'input window, operand 0, single buffered']
    #allocation5 [shape = 's32[2]{0}', space=sflag, size = 0x8, scoped, tag = 'scoped memory for tpu_custom_call.1']
    #allocation6 [shape = 's32[2]{0}', space=sflag, size = 0x8, scoped, tag = 'scoped memory for tpu_custom_call.1']
    #allocation7 [shape = 'u8[32768]{0}', space=vmem, size = 0x8000, scoped, tag = 'input window, operand 1']
    #allocation8 [shape = 's32[2]{0}', space=sflag, size = 0x8, scoped, tag = 'scoped memory for tpu_custom_call.1']
    #allocation9 [shape = 'u8[8192]{0}', space=vmem, size = 0x2000, scoped, tag = 'output window, operand 0']
    %7 = vsyncpa [#allocation5], 0
    %8 = vsyncpa [#allocation8], 0
    %s9 = scalar_lea.sflag [#allocation8], 1
    %10 = vsyncpa %s9, 0
    %11 = vsyncpa [#allocation6], 0
    %s12 = scalar_lea.sflag [#allocation6], 1
    %13 = vsyncpa %s12, 0
    loop: start=0, step=1, limit=4
    $region2: #{tpu_custom_call.1} parent=1 // loop_pre_header
      _
    $region3: #{tpu_custom_call.1} parent=1 // loop_header
      %s15 = sphi 0, %s19
      %p16 = scmp.ge.s32.totalorder %s15, 4
      %s22 = sphi 0, %s41
      %s23 = sphi 0, %s37
      %s24 = sphi 0, %s33
      %s25 = sphi 0, %s22
      %s26 = sphi 0, %s23
      %s27 = sphi 0, %s24
      %s28 = sphi 0, %s25
      %s29 = sphi 0, %s26
      %s30 = sphi 0, %s27
      %s44 = sphi 0, %s46
      %s47 = sphi 0, %s44
      %s48 = sphi 0, %s47
      %s64 = sphi 0, %s48
      %s72 = sphi 0, %s74
      %s75 = sphi 0, %s72
      %s76 = sphi 0, %s75
      %s92 = sphi 0, %s76
      %s100 = sphi 0, %s102
      %s103 = sphi 0, %s100
      %s104 = sphi 0, %s103
      %s120 = sphi 0, %s104
    $region4: #{tpu_custom_call.1} parent=1 // loop_header_branch
      %18 = sbr.rel (%p16) target = $region8
    $region5: #{tpu_custom_call.1} parent=1 // loop_body
      %s20 = ssub.s32 %s15, 1
      %s21 = ssub.s32 %s15, 2
      %s31 = sadd.s32 1, %s24
      %p32 = scmp.ge.s32.totalorder %s31, 1
      %s33 = scalar_select %p32, 0, %s31
      %s34 = sadd.s32 1, %s23
      %s35 = scalar_select %p32, %s34, %s23
      %p36 = scmp.ge.s32.totalorder %s35, 2
      %s37 = scalar_select %p36, 0, %s35
      %s38 = sadd.s32 1, %s22
      %s39 = scalar_select %p36, %s38, %s22
      %p40 = scmp.ge.s32.totalorder %s39, 1
      %s41 = scalar_select %p40, 0, %s39
      %s42 = ssub.s32 %s22, %s41
      %p43 = scmp.eq.s32.totalorder %s42, 0
      %s45 = sadd.s32 %s44, 1
      %s46 = scalar_select %p43, %s44, %s45
      %p49 = pneg %p43
      %p50 = scmp.eq.s32.totalorder %s15, 1
      %p51 = por %p49, %p50
      %p52 = scmp.ne.s32.totalorder %s44, %s47
      %p53 = scmp.eq.s32.totalorder %s15, 0
      %p54 = por %p52, %p53
      %p55 = scmp.ne.s32.totalorder %s44, %s47
      %p56 = scmp.eq.s32.totalorder %s20, 1
      %p57 = por %p55, %p56
      %p58 = scmp.ne.s32.totalorder %s47, %s48
      %p59 = scmp.eq.s32.totalorder %s20, 0
      %p60 = por %p58, %p59
      %p61 = scmp.ne.s32.totalorder %s47, %s48
      %p62 = scmp.eq.s32.totalorder %s21, 1
      %p63 = por %p61, %p62
      %p65 = scmp.ne.s32.totalorder %s48, %s64
      %p66 = scmp.eq.s32.totalorder %s21, 0
      %p67 = por %p65, %p66
      %s68 = ssub.s32 %s23, %s37
      %s69 = ssub.s32 %s24, %s33
      %s70 = sor.u32 %s68, %s69
      %p71 = scmp.eq.s32.totalorder %s70, 0
      %s73 = sadd.s32 %s72, 1
      %s74 = scalar_select %p71, %s72, %s73
      %p77 = pneg %p71
      %p78 = scmp.eq.s32.totalorder %s15, 1
      %p79 = por %p77, %p78
      %p80 = scmp.ne.s32.totalorder %s72, %s75
      %p81 = scmp.eq.s32.totalorder %s15, 0
      %p82 = por %p80, %p81
      %p83 = scmp.ne.s32.totalorder %s72, %s75
      %p84 = scmp.eq.s32.totalorder %s20, 1
      %p85 = por %p83, %p84
      %p86 = scmp.ne.s32.totalorder %s75, %s76
      %p87 = scmp.eq.s32.totalorder %s20, 0
      %p88 = por %p86, %p87
      %p89 = scmp.ne.s32.totalorder %s75, %s76
      %p90 = scmp.eq.s32.totalorder %s21, 1
      %p91 = por %p89, %p90
      %p93 = scmp.ne.s32.totalorder %s76, %s92
      %p94 = scmp.eq.s32.totalorder %s21, 0
      %p95 = por %p93, %p94
      %s96 = ssub.s32 %s23, %s37
      %s97 = ssub.s32 %s22, %s41
      %s98 = sor.u32 %s96, %s97
      %p99 = scmp.eq.s32.totalorder %s98, 0
      %s101 = sadd.s32 %s100, 1
      %s102 = scalar_select %p99, %s100, %s101
      %p105 = pneg %p99
      %p106 = scmp.eq.s32.totalorder %s15, 1
      %p107 = por %p105, %p106
      %p108 = scmp.ne.s32.totalorder %s100, %s103
      %p109 = scmp.eq.s32.totalorder %s15, 0
      %p110 = por %p108, %p109
      %p111 = scmp.ne.s32.totalorder %s100, %s103
      %p112 = scmp.eq.s32.totalorder %s20, 1
      %p113 = por %p111, %p112
      %p114 = scmp.ne.s32.totalorder %s103, %s104
      %p115 = scmp.eq.s32.totalorder %s20, 0
      %p116 = por %p114, %p115
      %p117 = scmp.ne.s32.totalorder %s103, %s104
      %p118 = scmp.eq.s32.totalorder %s21, 1
      %p119 = por %p117, %p118
      %p121 = scmp.ne.s32.totalorder %s104, %s120
      %p122 = scmp.eq.s32.totalorder %s21, 0
      %p123 = por %p121, %p122
      %p124 = scmp.le.s32.totalorder 1, %s15
      %p125 = scmp.lt.s32.totalorder %s15, 3
      %p126 = pnand %p124, %p125
      %p127 = pneg %p126
      // Predicated region
      $region9: #{tpu_custom_call.1} parent=5 // pred_check
        _
      $region10: #{tpu_custom_call.1} parent=5 // pred_check_branch
        %129 = sbr.rel (%p126) target = $region12
      $region11: #{tpu_custom_call.1} parent=5 // pred_region
        %s130 = ssub.s32 %s15, 1
        // Predicated region
        $region13: #{tpu_custom_call.1} parent=11 // pred_check
          %p131 = pneg %p60
        $region14: #{tpu_custom_call.1} parent=11 // pred_check_branch
          %133 = sbr.rel (%p131) target = $region16
        $region15: #{tpu_custom_call.1} parent=11 // pred_region
          %s134 = smul.u32 2, %s25
          %136 = vsyncadd [#allocation5], 0
          %s137 = smul.addr %s134, 4
          %s138 = scalar_lea.hbm %s0, %s137
          %s139 = sshll.u32 %s138, 4
          %s140 = int_to_ptr.hbm [resolvable:$true] %s139
          %s141 = sshll.u32 [#allocation4], 4
          %s142 = int_to_ptr.vmem [resolvable:$true] %s141
          %147 = dma.hbm_to_vmem [thread:$0]  %s140, 128, %s142, [#allocation5], 64, 64, 4
        $region16: #{tpu_custom_call.1} parent=11 // pred_fallthru
          _
      $region12: #{tpu_custom_call.1} parent=5 // pred_fallthru
        _
      %p148 = scmp.lt.s32.totalorder %s15, 2
      // Predicated region
      $region17: #{tpu_custom_call.1} parent=5 // pred_check
        %p149 = pneg %p148
      $region18: #{tpu_custom_call.1} parent=5 // pred_check_branch
        %151 = sbr.rel (%p149) target = $region20
      $region19: #{tpu_custom_call.1} parent=5 // pred_region
        // Predicated region
        $region21: #{tpu_custom_call.1} parent=19 // pred_check
          %p152 = pneg %p82
        $region22: #{tpu_custom_call.1} parent=19 // pred_check_branch
          %154 = sbr.rel (%p152) target = $region24
        $region23: #{tpu_custom_call.1} parent=19 // pred_region
          %s155 = sand.u32 %s72, 1
          %s156 = scalar_lea.sflag [#allocation8], %s155
          %s157 = sand.u32 %s72, 1
          %s158 = smul.addr %s157, 32
          %s159 = scalar_lea.vmem [#allocation7], %s158
          %161 = vsyncadd %s156, 0
          %s162 = smul.addr %s23, 8
          %s163 = sadd.s32 %s24, %s162
          %s164 = smul.addr %s163, 4
          %s165 = scalar_lea.hbm %s1, %s164
          %s166 = sshll.u32 %s165, 4
          %s167 = int_to_ptr.hbm [resolvable:$true] %s166
          %s168 = sshll.u32 %s159, 4
          %s169 = int_to_ptr.vmem [resolvable:$true] %s168
          %174 = dma.hbm_to_vmem [thread:$0]  %s167, 512, %s169, %s156, 64, 64, 4
        $region24: #{tpu_custom_call.1} parent=19 // pred_fallthru
          _
      $region20: #{tpu_custom_call.1} parent=5 // pred_fallthru
        _
      %p175 = scmp.le.s32.totalorder 1, %s15
      %p176 = scmp.lt.s32.totalorder %s15, 3
      %p177 = pnand %p175, %p176
      %p178 = pneg %p177
      // Predicated region
      $region25: #{tpu_custom_call.1} parent=5 // pred_check
        _
      $region26: #{tpu_custom_call.1} parent=5 // pred_check_branch
        %180 = sbr.rel (%p177) target = $region28
      $region27: #{tpu_custom_call.1} parent=5 // pred_region
        %s181 = ssub.s32 %s15, 1
        // Predicated region
        $region29: #{tpu_custom_call.1} parent=27 // pred_check
          %p182 = pneg %p60
        $region30: #{tpu_custom_call.1} parent=27 // pred_check_branch
          %184 = sbr.rel (%p182) target = $region32
        $region31: #{tpu_custom_call.1} parent=27 // pred_region
          %186 = dma.done [#allocation5], 128
        $region32: #{tpu_custom_call.1} parent=27 // pred_fallthru
          _
        %s187 = sand.u32 %s75, 1
        %s188 = scalar_lea.sflag [#allocation8], %s187
        %s189 = sand.u32 %s75, 1
        %s190 = smul.addr %s189, 32
        %s191 = scalar_lea.vmem [#allocation7], %s190
        // Predicated region
        $region33: #{tpu_custom_call.1} parent=27 // pred_check
          %p192 = pneg %p88
        $region34: #{tpu_custom_call.1} parent=27 // pred_check_branch
          %194 = sbr.rel (%p192) target = $region36
        $region35: #{tpu_custom_call.1} parent=27 // pred_region
          %196 = dma.done %s188, 512
        $region36: #{tpu_custom_call.1} parent=27 // pred_fallthru
          _
        %p197 = pneg %p60
        %p198 = pneg %p57
        %s199 = sand.u32 %s75, 1
        %s200 = scalar_lea.sflag [#allocation8], %s199
        %s201 = sand.u32 %s75, 1
        %s202 = smul.addr %s201, 32
        %s203 = scalar_lea.vmem [#allocation7], %s202
        %p204 = pneg %p88
        %p205 = pneg %p85
        %p206 = pneg %p116
        %p207 = pneg %p113
        %s208 = sand.u32 %s103, 1
        %s209 = scalar_lea.sflag [#allocation6], %s208
        %s210 = sand.u32 %s103, 1
        %s211 = smul.addr %s210, 8
        %s212 = scalar_lea.vmem [#allocation9], %s211
        %s213 = smul.u32 2, %s25
        %s214 = smul.u32 2, %s25
        %p216 = scmp.eq.s32.totalorder %s27, 0
        // Predicated region
        $region37: #{tpu_custom_call.1} parent=27 // pred_check
          %p217 = pneg %p216
        $region38: #{tpu_custom_call.1} parent=27 // pred_check_branch
          %219 = sbr.rel (%p217) target = $region40
        $region39: #{tpu_custom_call.1} parent=27 // pred_region
          %vm220 = vcmask 7168
          %221 = vst.msk [vmem:[#allocation2] sm:$0xff] %vm220, 0.0
          %222 = vst.msk [vmem:[#allocation2 + $0x8] sm:$0xff] %vm220, 0.0
          %223 = vst.msk [vmem:[#allocation3] sm:$0xff] %vm220, 0.0
          %224 = vst.msk [vmem:[#allocation3 + $0x8] sm:$0xff] %vm220, 0.0
        $region40: #{tpu_custom_call.1} parent=27 // pred_fallthru
          _
        %v225 = vld [vmem:[#allocation4] sm:$0xf]
        %v226 = vld [vmem:[#allocation4 + $0x4] sm:$0xf]
        %v227 = vld [vmem:[%s191] sm:$0xf]
        %v228 = vld [vmem:[%s191 + $0x4] sm:$0xf]
        %v229 = vld [vmem:[%s191 + $0x8] sm:$0xf]
        %v230 = vld [vmem:[%s191 + $0xc] sm:$0xf]
        %v231 = vld [vmem:[%s191 + $0x10] sm:$0xf]
        %v232 = vld [vmem:[%s191 + $0x14] sm:$0xf]
        %v233 = vld [vmem:[%s191 + $0x18] sm:$0xf]
        %v234 = vld [vmem:[%s191 + $0x1c] sm:$0xf]
        %v237 = vunpack.c.l.b16 %v225
        %v238 = vunpack.c.l.b16 %v226
        %v239 = vpack.c.b16 %v238, %v237
        %v248 = vunpack.c.l.b16 %v227
        %v249 = vunpack.c.l.b16 %v228
        %v250 = vunpack.c.l.b16 %v229
        %v251 = vunpack.c.l.b16 %v230
        %v252 = vunpack.c.l.b16 %v231
        %v253 = vunpack.c.l.b16 %v232
        %v254 = vunpack.c.l.b16 %v233
        %v255 = vunpack.c.l.b16 %v234
        %v256 = vpack.c.b16 %v249, %v248
        %v257 = vpack.c.b16 %v251, %v250
        %v258 = vpack.c.b16 %v253, %v252
        %v259 = vpack.c.b16 %v255, %v254
        %vm264 = vcmask 523264
        %v266 = vsel %vm264, %v239, 0
        %268 = vmatpush.bf16.msra.mxu0 0
        %269 = vmatpush.bf16.msra.mxu0 0
        %270 = vmatpush.bf16.msra.mxu0 0
        %271 = vmatpush.bf16.msra.mxu0 0
        %272 = vmatpush.bf16.msra.mxu0 %v259
        %273 = vmatpush.bf16.msra.mxu0 %v258
        %274 = vmatpush.bf16.msra.mxu0 %v257
        %275 = vmatpush.bf16.msra.mxu0 %v256
        %276 = vmatmul.bf16.gmra.mxu0 %v266
        %v277 = vpop.f32.mrf.mxu0
        %v278 = vadd.f32 0.0, %v277
        %v279 = vpop.f32.mrf.mxu0
        %v280 = vadd.f32 0.0, %v279
        %281 = vdwg.mxu0
        %v282 = vld [vmem:[#allocation2] sm:$0xff]
        %v283 = vld [vmem:[#allocation2 + $0x8] sm:$0xff]
        %284 = vadd.xlane.f32.xlu0 %v278
        %v285 = vpop.xlane.xlu0 %284
        %286 = vadd.xlane.f32.xlu0 %v280
        %v287 = vpop.xlane.xlu0 %286
        %v288 = vadd.f32 %v282, %v285
        %v289 = vadd.f32 %v283, %v287
        %vm290 = vcmask 7168
        %291 = vst.msk [vmem:[#allocation2] sm:$0xff] %vm290, %v288
        %292 = vst.msk [vmem:[#allocation2 + $0x8] sm:$0xff] %vm290, %v289
        %v293 = vld [vmem:[#allocation3] sm:$0xff]
        %v294 = vld [vmem:[#allocation3 + $0x8] sm:$0xff]
        %v295 = vmul.f32 %v278, %v278
        %v296 = vmul.f32 %v280, %v280
        %297 = vadd.xlane.f32.xlu0 %v295
        %v298 = vpop.xlane.xlu0 %297
        %299 = vadd.xlane.f32.xlu0 %v296
        %v300 = vpop.xlane.xlu0 %299
        %v301 = vadd.f32 %v293, %v298
        %v302 = vadd.f32 %v294, %v300
        %303 = vst.msk [vmem:[#allocation3] sm:$0xff] %vm290, %v301
        %304 = vst.msk [vmem:[#allocation3 + $0x8] sm:$0xff] %vm290, %v302
        %s305 = smul.u32 %s27, 128
        %v306 = vpack.c.bf16 %v278, %v278
        %v307 = vpack.c.bf16 %v280, %v280
        %s308 = sshra.s32 %s305, 7
        %s309 = sand.u32 %s305, 127
        %s310 = smul.addr %s308, 4
        %s311 = scalar_lea.vmem %s212, %s310 [#allocation9]
        %312 = vst [vmem:[%s311] sm:$0xf] %v306
        %313 = vst [vmem:[%s311 + $0x4] sm:$0xf] %v307
        // Predicated region
        $region41: #{tpu_custom_call.1} parent=27 // pred_check
          %p314 = pneg %p216
        $region42: #{tpu_custom_call.1} parent=27 // pred_check_branch
          %316 = sbr.rel (%p314) target = $region44
        $region43: #{tpu_custom_call.1} parent=27 // pred_region
          %v317 = vld [vmem:[#allocation2] sm:$0xff]
          %v318 = vld [vmem:[#allocation2 + $0x8] sm:$0xff]
          %v319 = vmul.f32 %v317, 0.015625
          %v320 = vmul.f32 %v318, 0.015625
          %v321 = vld [vmem:[#allocation3] sm:$0xff]
          %v322 = vld [vmem:[#allocation3 + $0x8] sm:$0xff]
          %v323 = vmul.f32 %v321, 0.015625
          %v324 = vmul.f32 %v322, 0.015625
          %v325 = vmul.f32 %v319, %v319
          %v326 = vmul.f32 %v320, %v320
          %v327 = vsub.f32 %v323, %v325
          %v328 = vsub.f32 %v324, %v326
          %v329 = vmax.f32 %v327, 0.0
          %v330 = vmax.f32 %v328, 0.0
          %v331 = vadd.f32 %v329, 1e-05
          %v332 = vadd.f32 %v330, 1e-05
          %v333 = vrsqrt.pop %v331
          %v334 = vmul.f32 %v333, %v331
          %v335 = vmul.f32 %v334, %v333
          %v336 = vmul.f32 0.5, %v335
          %v337 = vsub.f32 1.5, %v336
          %v338 = vmul.f32 %v333, %v337
          %vm339 = vweird.f32 %v331
          %vm340 = vweird.f32 %v333
          %vm341 = vmor %vm339, %vm340
          %v342 = vsel %vm341, %v333, %v338
          %v343 = vrsqrt.pop %v332
          %v344 = vmul.f32 %v343, %v332
          %v345 = vmul.f32 %v344, %v343
          %v346 = vmul.f32 0.5, %v345
          %v347 = vsub.f32 1.5, %v346
          %v348 = vmul.f32 %v343, %v347
          %vm349 = vweird.f32 %v332
          %vm350 = vweird.f32 %v343
          %vm351 = vmor %vm349, %vm350
          %v352 = vsel %vm351, %v343, %v348
          %v353 = vld [vmem:[%s212] sm:$0xf]
          %v354 = vld [vmem:[%s212 + $0x4] sm:$0xf]
          %v355 = vunpack.c.l.bf16 %v353
          %v356 = vunpack.c.l.bf16 %v354
          %358 = vset.pattern.permute.xlu0 0
          %359 = vperm.xlu0 %358, %v319
          %v360 = vpop.permute.xlu0 %359
          %363 = vset.pattern.permute.xlu0 0
          %364 = vperm.xlu0 %363, %v320
          %v365 = vpop.permute.xlu0 %364
          %v367 = vsub.f32 %v355, %v360
          %v368 = vsub.f32 %v356, %v365
          %370 = vset.pattern.permute.xlu0 0
          %371 = vperm.xlu0 %370, %v342
          %v372 = vpop.permute.xlu0 %371
          %375 = vset.pattern.permute.xlu0 0
          %376 = vperm.xlu0 %375, %v352
          %v377 = vpop.permute.xlu0 %376
          %v379 = vmul.f32 %v367, %v372
          %v380 = vmul.f32 %v368, %v377
          %vm381 = vcmp.ge.f32.partialorder %v379, 0.0
          %vm382 = vcmp.ge.f32.partialorder %v380, 0.0
          %v383 = vmul.f32 %v379, 0.2
          %v384 = vmul.f32 %v380, 0.2
          %v385 = vsel %vm381, %v379, %v383
          %v386 = vsel %vm382, %v380, %v384
          %v387 = vpack.c.bf16 %v385, %v385
          %v388 = vpack.c.bf16 %v386, %v386
          %389 = vst [vmem:[%s212] sm:$0xf] %v387
          %390 = vst [vmem:[%s212 + $0x4] sm:$0xf] %v388
        $region44: #{tpu_custom_call.1} parent=27 // pred_fallthru
          _
        %s391 = sand.u32 %s103, 1
        %s392 = scalar_lea.sflag [#allocation6], %s391
        %s393 = sand.u32 %s103, 1
        %s394 = smul.addr %s393, 8
        %s395 = scalar_lea.vmem [#allocation9], %s394
        // Predicated region
        $region45: #{tpu_custom_call.1} parent=27 // pred_check
          %p396 = pneg %p113
        $region46: #{tpu_custom_call.1} parent=27 // pred_check_branch
          %398 = sbr.rel (%p396) target = $region48
        $region47: #{tpu_custom_call.1} parent=27 // pred_region
          %s399 = smul.u32 2, %s25
          %401 = vsyncadd %s392, 0
          %s402 = smul.addr %s26, 2
          %s403 = sadd.s32 %s399, %s402
          %s404 = smul.addr %s403, 4
          %s405 = scalar_lea.hbm %s2, %s404
          %s406 = sshll.u32 %s395, 4
          %s407 = int_to_ptr.vmem [resolvable:$true] %s406
          %s408 = sshll.u32 %s405, 4
          %s409 = int_to_ptr.hbm [resolvable:$true] %s408
          %414 = dma.vmem_to_hbm [thread:$0]  %s407, 128, %s409, %s392, 64, 64, 4
        $region48: #{tpu_custom_call.1} parent=27 // pred_fallthru
          _
      $region28: #{tpu_custom_call.1} parent=5 // pred_fallthru
        _
      %p415 = scmp.le.s32.totalorder 2, %s15
      // Predicated region
      $region49: #{tpu_custom_call.1} parent=5 // pred_check
        %p416 = pneg %p415
      $region50: #{tpu_custom_call.1} parent=5 // pred_check_branch
        %418 = sbr.rel (%p416) target = $region52
      $region51: #{tpu_custom_call.1} parent=5 // pred_region
        %s419 = ssub.s32 %s15, 2
        // Predicated region
        $region53: #{tpu_custom_call.1} parent=51 // pred_check
          %p420 = pneg %p119
        $region54: #{tpu_custom_call.1} parent=51 // pred_check_branch
          %422 = sbr.rel (%p420) target = $region56
        $region55: #{tpu_custom_call.1} parent=51 // pred_region
          %s423 = sand.u32 %s104, 1
          %s424 = scalar_lea.sflag [#allocation6], %s423
          %s425 = sand.u32 %s104, 1
          %s426 = smul.addr %s425, 8
          %s427 = scalar_lea.vmem [#allocation9], %s426
          %429 = dma.done %s424, 128
        $region56: #{tpu_custom_call.1} parent=51 // pred_fallthru
          _
      $region52: #{tpu_custom_call.1} parent=5 // pred_fallthru
        _
    $region6: #{tpu_custom_call.1} parent=1 // loop_footer
      %s19 = sadd.s32 1, %s15
    $region7: #{tpu_custom_call.1} parent=1 // loop_footer_branch
      %14 = sbr.rel target = $region3
    $region8: #{tpu_custom_call.1} parent=1 // loop_exit
      _
    %430 = vsyncpa [#allocation5], 1
    %s431 = scalar_lea.sflag [#allocation5], 1
    %432 = vsyncpa %s431, 1
    %433 = vsyncpa [#allocation8], 1
    %s434 = scalar_lea.sflag [#allocation8], 1
    %435 = vsyncpa %s434, 1
    %436 = vsyncpa [#allocation6], 1
    %s437 = scalar_lea.sflag [#allocation6], 1
    %438 = vsyncpa %s437, 1

</llo_original>
